<compile_context>
chip_gen: v6e
topology: v6e:2x2x1
jax: 0.10.0
libtpu: 0.0.40
codegen_flags: <defaults>
</compile_context>

<pallas_src>
import functools

import jax
import jax.numpy as jnp
from jax import lax
from jax.experimental import pallas as pl
from jax.experimental.pallas import tpu as pltpu

SUBLANE = 8
LANE = 128


def _round_up(x, m):
    return ((x + m - 1) // m) * m


def _cdiv(a, b):
    return -(-a // b)


def _vmem_capacity_bytes():
    try:
        info = pltpu.get_tpu_info()
        for name in ("vmem_capacity_bytes", "vmem_bytes", "vmem_size_bytes"):
            cap = getattr(info, name, None)
            if cap:
                return int(cap)
    except Exception:
        pass
    return 64 * 1024 * 1024  # conservative fallback (works on every generation)


# ---------------------------------------------------------------------------
# Fused single-pass kernels: scores + softmax (used when L fits one tile)
# ---------------------------------------------------------------------------
def _dot_fused_kernel(h_ref, e_ref, rb_ref, out_ref):
    # h_ref: (Bt, H) = hidden ('dot') or hidden @ W ('general')
    # e_ref: (L, Bt, H) encoder block; rb_ref: (Bt, 1) row bias (h.b, zeros for dot)
    # out_ref: (Bt, L) softmax probabilities
    # TODO(synk): on v7x move the H contraction onto the MXU (batched dot) so the
    # cross-lane reduce does not saturate the XLU slot.
    s = jnp.sum(h_ref[...][None, :, :] * e_ref[...], axis=2)          # (L, Bt)
    en = s.T + rb_ref[...]                                            # (Bt, L)
    m = jnp.max(en, axis=1, keepdims=True)
    p = jnp.exp(en - m)
    denom = jnp.sum(p, axis=1, keepdims=True)
    out_ref[...] = p * pl.reciprocal(denom, approx=False)


def _concat_fused_kernel(hwb_ref, e_ref, w2t_ref, v_ref, out_ref):
    # hwb_ref: (Bt, H) = hidden @ W[:, :H].T + b ; e_ref: (L, Bt, H), Bt % 8 == 0
    # w2t_ref: (H, H) = W[:, H:].T ; v_ref: (1, H) ; out_ref: (Bt, L)
    l, bt, h = e_ref.shape
    e2 = e_ref[...].reshape(l * bt, h)          # Bt multiple of 8 -> layout no-op
    ew = jnp.dot(e2, w2t_ref[...], preferred_element_type=jnp.float32)
    energy = jnp.tanh(ew.reshape(l, bt, h) + hwb_ref[...][None, :, :])
    en = jnp.sum(v_ref[...] * energy, axis=2).T                       # (Bt, L)
    m = jnp.max(en, axis=1, keepdims=True)
    p = jnp.exp(en - m)
    denom = jnp.sum(p, axis=1, keepdims=True)
    out_ref[...] = p * pl.reciprocal(denom, approx=False)


# ---------------------------------------------------------------------------
# Two-pass path (large L): tiled score kernels + lane-dense row softmax
# ---------------------------------------------------------------------------
def _dot_energy_kernel(l_actual, nl, h_ref, e_ref, rb_ref, out_ref):
    li = pl.program_id(0) % nl
    lt = e_ref.shape[0]
    s = jnp.sum(h_ref[...][None, :, :] * e_ref[...], axis=2)          # (Lt, Bt)
    en = s.T + rb_ref[...]                                            # (Bt, Lt)
    col = li * lt + lax.broadcasted_iota(jnp.int32, en.shape, 1)
    out_ref[...] = jnp.where(col < l_actual, en, -jnp.inf)


def _concat_energy_kernel(l_actual, nl, hwb_ref, e_ref, w2t_ref, v_ref, out_ref):
    li = pl.program_id(0) % nl
    lt, bt, h = e_ref.shape
    e2 = e_ref[...].reshape(lt * bt, h)
    ew = jnp.dot(e2, w2t_ref[...], preferred_element_type=jnp.float32)
    energy = jnp.tanh(ew.reshape(lt, bt, h) + hwb_ref[...][None, :, :])
    en = jnp.sum(v_ref[...] * energy, axis=2).T
    col = li * lt + lax.broadcasted_iota(jnp.int32, en.shape, 1)
    out_ref[...] = jnp.where(col < l_actual, en, -jnp.inf)


def _softmax_kernel(e_ref, out_ref):
    e = e_ref[...]
    m = jnp.max(e, axis=1, keepdims=True)
    p = jnp.exp(e - m)                          # exp(-inf) = 0 on masked pads
    out_ref[...] = p * pl.reciprocal(jnp.sum(p, axis=1, keepdims=True),
                                     approx=False)


# ---------------------------------------------------------------------------
# Module wrapper
# ---------------------------------------------------------------------------
class AttnPallas:
    """JAX/Pallas port of the PyTorch Attn module (Luong attention)."""

    def __init__(self, method, hidden_size, key):
        if method not in ('dot', 'general', 'concat'):
            raise ValueError(method, 'is not an appropriate attention method.')
        self.method = method
        self.hidden_size = hidden_size
        H = hidden_size
        if method == 'general':
            k1, k2 = jax.random.split(key)
            bound = 1.0 / float(H) ** 0.5
            self.W = jax.random.uniform(k1, (H, H), jnp.float32, -bound, bound)
            self.b = jax.random.uniform(k2, (H,), jnp.float32, -bound, bound)
        elif method == 'concat':
            k1, k2, k3 = jax.random.split(key, 3)
            bound = 1.0 / float(2 * H) ** 0.5
            self.W = jax.random.uniform(k1, (H, 2 * H), jnp.float32, -bound, bound)
            self.b = jax.random.uniform(k2, (H,), jnp.float32, -bound, bound)
            self.v = jax.random.normal(k3, (H,), jnp.float32)
            # cat(h, enc) @ W.T == h @ W[:, :H].T + enc @ W[:, H:].T
            self.W1T = jnp.asarray(self.W[:, :H].T)
            self.W2T = jnp.asarray(self.W[:, H:].T)
            self.v2d = self.v.reshape(1, H)

    def __call__(self, hidden, encoder_outputs, *, l_tile=None):
        # hidden: (1, B, H), encoder_outputs: (L, B, H); l_tile is a test hook
        # that forces the two-pass path with a given (multiple-of-128) L tile.
        L, B, H = encoder_outputs.shape
        cap = _vmem_capacity_bytes()
        budget = max(2 * 1024 * 1024, cap // 8)   # one enc tile (Pallas double-buffers)

        h2 = hidden[0]
        if h2.dtype != jnp.float32:
            h2 = h2.astype(jnp.float32)
        enc = encoder_outputs
        if enc.dtype != jnp.float32:
            enc = enc.astype(jnp.float32)

        B_eff = B
        if self.method == 'concat' and B % SUBLANE != 0:
            # The concat kernel merges (L, Bt) sublanes -> keep Bt a multiple of 8.
            # TODO(synk): avoid this small B-only pad with a Bt-agnostic reshape.
            B_eff = _round_up(B, SUBLANE)
            enc = jnp.pad(enc, ((0, 0), (0, B_eff - B), (0, 0)))
            h2 = jnp.pad(h2, ((0, B_eff - B), (0, 0)))

        # ---- tile selection (generation aware via VMEM capacity) -------------
        b_t = B_eff if B_eff <= 128 else 128
        while b_t > SUBLANE and 128 * b_t * H * 4 > budget:
            b_t = max(SUBLANE, _round_up(b_t // 2, SUBLANE))
        nb = _cdiv(B_eff, b_t)
        per_row_bytes = b_t * (H + 1) * 4         # enc row + output row per L step

        if l_tile is None:
            fused = L * per_row_bytes <= budget
            L_TILE = None
        else:
            assert l_tile % LANE == 0
            fused = L <= l_tile
            L_TILE = int(l_tile)
        if not fused and L_TILE is None:
            L_TILE = max(LANE, min(16384, (budget // per_row_bytes) // LANE * LANE))

        l_block = L if fused else L_TILE
        tile_bytes = l_block * b_t * (H + 1) * 4
        vmem_limit = int(min(0.7 * cap,
                             max(32 * 1024 * 1024, 3 * tile_bytes + 16 * 1024 * 1024)))

        # ---- per-method wrapper precompute (O(B*H^2) at most, done once) -----
        prec = lax.Precision.HIGHEST
        if self.method == 'dot':
            hq = h2
            rb = jnp.zeros((B_eff, 1), jnp.float32)
        elif self.method == 'general':
            # sum_k h_k (enc@W.T + b)_k = enc . (h @ W) + (h . b)
            hq = jnp.dot(h2, self.W, precision=prec)
            rb = jnp.dot(h2, self.b, precision=prec)[:, None]
        else:  # concat
            hwb = jnp.dot(h2, self.W1T, precision=prec) + self.b[None, :]

        base_flops = 2 * L * B_eff * H + 6 * B_eff * L
        base_bytes = 4 * (L * B_eff * H + 2 * B_eff * H + B_eff * L)

        # ------------------------------------------------------------------ #
        # Path A: fused scores + softmax in a single pallas_call
        # ------------------------------------------------------------------ #
        if fused:
            e_spec = pl.BlockSpec((L, b_t, H), lambda b: (0, b, 0))
            hb_spec = pl.BlockSpec((b_t, H), lambda b: (b, 0))
            out_spec = pl.BlockSpec((b_t, L), lambda b: (b, 0))
            if self.method in ('dot', 'general'):
                kernel = _dot_fused_kernel
                args = (hq, enc, rb)
                in_specs = [hb_spec, e_spec, pl.BlockSpec((b_t, 1), lambda b: (b, 0))]
                cost = pl.CostEstimate(flops=base_flops, transcendentals=B_eff * L,
                                       bytes_accessed=base_bytes)
            else:
                kernel = _concat_fused_kernel
                args = (hwb, enc, self.W2T, self.v2d)
                in_specs = [hb_spec, e_spec,
                            pl.BlockSpec((H, H), lambda b: (0, 0)),
                            pl.BlockSpec((1, H), lambda b: (0, 0))]
                cost = pl.CostEstimate(
                    flops=base_flops + 2 * L * B_eff * H * H,
                    transcendentals=L * B_eff * H + B_eff * L,
                    bytes_accessed=base_bytes + 4 * H * H)
            probs = pl.pallas_call(
                kernel,
                out_shape=jax.ShapeDtypeStruct((B_eff, L), jnp.float32),
                grid=(nb,),
                in_specs=in_specs,
                out_specs=out_spec,
                compiler_params=pltpu.CompilerParams(
                    dimension_semantics=("parallel",),
                    vmem_limit_bytes=vmem_limit),
                cost_estimate=cost,
            )(*args)
            return probs[:B][:, None, :]          # (B, 1, L) == .unsqueeze(1)

        # ------------------------------------------------------------------ #
        # Path B: tiled scores (flattened parallel grid) + row softmax
        # ------------------------------------------------------------------ #
        nl = _cdiv(L, L_TILE)
        L_pad = nl * L_TILE
        # Flattened 1-D parallel grid: i -> (b = i // nl, l = i % nl); keeps v7x's
        # second TensorCore busy even when nb == 1, harmless on single-TC parts.
        e_spec = pl.BlockSpec((L_TILE, b_t, H), lambda i: (i % nl, i // nl, 0))
        hb_spec = pl.BlockSpec((b_t, H), lambda i: (i // nl, 0))
        out_spec = pl.BlockSpec((b_t, L_TILE), lambda i: (i // nl, i % nl))
        if self.method in ('dot', 'general'):
            kernel = functools.partial(_dot_energy_kernel, L, nl)
            args = (hq, enc, rb)
            in_specs = [hb_spec, e_spec, pl.BlockSpec((b_t, 1), lambda i: (i // nl, 0))]
            cost = pl.CostEstimate(flops=base_flops, transcendentals=0,
                                   bytes_accessed=base_bytes)
        else:
            kernel = functools.partial(_concat_energy_kernel, L, nl)
            args = (hwb, enc, self.W2T, self.v2d)
            in_specs = [hb_spec, e_spec,
                        pl.BlockSpec((H, H), lambda i: (0, 0)),
                        pl.BlockSpec((1, H), lambda i: (0, 0))]
            cost = pl.CostEstimate(flops=base_flops + 2 * L * B_eff * H * H,
                                   transcendentals=L * B_eff * H,
                                   bytes_accessed=base_bytes + 4 * H * H)

        energies = pl.pallas_call(
            kernel,
            out_shape=jax.ShapeDtypeStruct((B_eff, L_pad), jnp.float32),
            grid=(nb * nl,),
            in_specs=in_specs,
            out_specs=out_spec,
            compiler_params=pltpu.CompilerParams(
                dimension_semantics=("parallel",),
                vmem_limit_bytes=vmem_limit),
            cost_estimate=cost,
        )(*args)

        # Pass 2: lane-dense row softmax (pad columns are already -inf).
        row_t = B_eff
        while row_t > SUBLANE and 4 * row_t * L_pad * 4 > 2 * budget:
            row_t = max(SUBLANE, _round_up(row_t // 2, SUBLANE))
        probs = pl.pallas_call(
            _softmax_kernel,
            out_shape=jax.ShapeDtypeStruct((B_eff, L_pad), jnp.float32),
            grid=(_cdiv(B_eff, row_t),),
            in_specs=[pl.BlockSpec((row_t, L_pad), lambda r: (r, 0))],
            out_specs=pl.BlockSpec((row_t, L_pad), lambda r: (r, 0)),
            compiler_params=pltpu.CompilerParams(
                dimension_semantics=("parallel",),
                vmem_limit_bytes=vmem_limit),
        )(energies)
        return probs[:B, :L][:, None, :]


# ---------------------------------------------------------------------------
# Pure-JAX reference (mirrors the PyTorch forward exactly)
# ---------------------------------------------------------------------------
def _reference(module, hidden, enc):
    if module.method == 'dot':
        scores = jnp.sum(hidden * enc, axis=2)
    elif module.method == 'general':
        energy = enc @ module.W.T + module.b
        scores = jnp.sum(hidden * energy, axis=2)
    else:
        h = jnp.broadcast_to(hidden, enc.shape)
        cat = jnp.concatenate([h, enc], axis=2)
        energy = jnp.tanh(cat @ module.W.T + module.b)
        scores = jnp.sum(module.v * energy, axis=2)
    return jax.nn.softmax(scores.T, axis=1)[:, None, :]


# ---------------------------------------------------------------------------
if __name__ == "__main__":
    key = jax.random.PRNGKey(0)
    ok = True
    cases = [
        ((8, 4, 32), None),     # decoder-style tiny L   -> fused single-pass path
        ((200, 12, 32), None),  # bigger (non-aligned) L -> still fused
        ((200, 12, 32), 128),   # force the two-pass tiled path (nl > 1)
    ]
    for (L, B, H), l_tile in cases:
        k_h, k_e, k_p = jax.random.split(jax.random.fold_in(key, 1000 * L + B), 3)
        hidden = jax.random.normal(k_h, (1, B, H), jnp.float32)
        encoder_outputs = jax.random.normal(k_e, (L, B, H), jnp.float32)
        for i, method in enumerate(('dot', 'general', 'concat')):
            attn = AttnPallas(method, H, jax.random.fold_in(k_p, i))
            out = jax.block_until_ready(attn(hidden, encoder_outputs, l_tile=l_tile))
            ref = _reference(attn, hidden, encoder_outputs)
            assert out.shape == (B, 1, L), (method, out.shape)
            if not jnp.allclose(out, ref, atol=1e-5, rtol=1e-5):
                ok = False
                print(f"MISMATCH method={method} L={L} B={B} l_tile={l_tile}: "
                      f"max err {float(jnp.max(jnp.abs(out - ref)))}")
    if ok:
        print("KERNEL_OK")
</pallas_src>

<mosaic_0001>
module attributes {stable_mosaic.version = 11 : i64} {
  func.func @_dot_fused_kernel(%arg0: i32, %arg1: memref<4x32xf32, #tpu.memory_space<vmem>>, %arg2: memref<8x4x32xf32, #tpu.memory_space<vmem>>, %arg3: memref<4x1xf32, #tpu.memory_space<vmem>>, %arg4: memref<4x8xf32, #tpu.memory_space<vmem>>) attributes {dimension_semantics = [#tpu.dimension_semantics<parallel>], iteration_bounds = array<i64: 1>, scalar_prefetch = 0 : i64, scratch_operands = 0 : i64, tpu.core_type = #tpu.core_type<tc>, window_params = [{transform_indices = @transform_0, window_bounds = array<i64: 4, 32>}, {transform_indices = @transform_1, window_bounds = array<i64: 8, 4, 32>}, {transform_indices = @transform_2, window_bounds = array<i64: 4, 1>}, {transform_indices = @transform_3, window_bounds = array<i64: 4, 8>}]} {
    %c0 = arith.constant 0 : index
    %c0_0 = arith.constant 0 : index
    %0 = vector.load %arg1[%c0, %c0_0] : memref<4x32xf32, #tpu.memory_space<vmem>>, vector<4x32xf32>
    %1 = vector.shape_cast %0 : vector<4x32xf32> to vector<1x4x32xf32>
    %c0_1 = arith.constant 0 : index
    %c0_2 = arith.constant 0 : index
    %c0_3 = arith.constant 0 : index
    %2 = vector.load %arg2[%c0_1, %c0_2, %c0_3] : memref<8x4x32xf32, #tpu.memory_space<vmem>>, vector<8x4x32xf32>
    %3 = vector.broadcast %1 : vector<1x4x32xf32> to vector<8x4x32xf32>
    %4 = arith.mulf %3, %2 : vector<8x4x32xf32>
    %cst = arith.constant dense<0.000000e+00> : vector<8x4xf32>
    %5 = vector.multi_reduction <add>, %4, %cst [2] : vector<8x4x32xf32> to vector<8x4xf32>
    %6 = tpu.transpose %5, [1, 0] : vector<8x4xf32> -> vector<4x8xf32>
    %c0_4 = arith.constant 0 : index
    %c0_5 = arith.constant 0 : index
    %7 = vector.load %arg3[%c0_4, %c0_5] : memref<4x1xf32, #tpu.memory_space<vmem>>, vector<4x1xf32>
    %8 = vector.broadcast %7 : vector<4x1xf32> to vector<4x8xf32>
    %9 = arith.addf %6, %8 : vector<4x8xf32>
    %cst_6 = arith.constant dense<0xFF800000> : vector<4xf32>
    %10 = vector.multi_reduction <maximumf>, %9, %cst_6 [1] : vector<4x8xf32> to vector<4xf32>
    %11 = vector.shape_cast %10 : vector<4xf32> to vector<4x1xf32>
    %12 = vector.broadcast %11 : vector<4x1xf32> to vector<4x8xf32>
    %13 = arith.subf %9, %12 : vector<4x8xf32>
    %14 = math.exp %13 : vector<4x8xf32>
    %cst_7 = arith.constant dense<0.000000e+00> : vector<4xf32>
    %15 = vector.multi_reduction <add>, %14, %cst_7 [1] : vector<4x8xf32> to vector<4xf32>
    %16 = vector.shape_cast %15 : vector<4xf32> to vector<4x1xf32>
    %17 = tpu.reciprocal %16 : vector<4x1xf32> -> vector<4x1xf32>
    %18 = vector.broadcast %17 : vector<4x1xf32> to vector<4x8xf32>
    %19 = arith.mulf %14, %18 : vector<4x8xf32>
    %c0_8 = arith.constant 0 : index
    %c0_9 = arith.constant 0 : index
    %20 = vector.load %arg4[%c0_8, %c0_9] : memref<4x8xf32, #tpu.memory_space<vmem>>, vector<4x8xf32>
    tpu.vector_store %arg4[%c0_8, %c0_9], %19 {strides = array<i32>} : memref<4x8xf32, #tpu.memory_space<vmem>>, vector<4x8xf32>,
    return
  }
  func.func @transform_0(%arg0: i32) -> (i32, i32) {
    %c0_i32 = arith.constant 0 : i32
    %c0_i32_0 = arith.constant 0 : i32
    return %arg0, %c0_i32 : i32, i32
  }
  func.func @transform_1(%arg0: i32) -> (i32, i32, i32) {
    %c0_i32 = arith.constant 0 : i32
    %c0_i32_0 = arith.constant 0 : i32
    %c0_i32_1 = arith.constant 0 : i32
    return %c0_i32, %arg0, %c0_i32_0 : i32, i32, i32
  }
  func.func @transform_2(%arg0: i32) -> (i32, i32) {
    %c0_i32 = arith.constant 0 : i32
    %c0_i32_0 = arith.constant 0 : i32
    return %arg0, %c0_i32 : i32, i32
  }
  func.func @transform_3(%arg0: i32) -> (i32, i32) {
    %c0_i32 = arith.constant 0 : i32
    %c0_i32_0 = arith.constant 0 : i32
    return %arg0, %c0_i32 : i32, i32
  }
}

</mosaic_0001>

<llo_original>
// kernel: tpu_custom_call.1
$region0: #{tpu_custom_call.1}
  #allocation0 [shape = 'u32[]', space=smem, size = 0x4, offset = 0x4, fixed_abs, tag = 'smem constant byte address 0x4 - core index']
  #allocation1 [shape = 'u32[144,128]{1,0:T(1,128)}', space=vmem, size = 0x12000, scoped, tag = 'internal scratch']
  %s0 = inlined_call_operand.vmem [shape: f32[4,32], index: 0, kind: input, shape index: {}]
  %s1 = inlined_call_operand.hbm [shape: f32[8,4,32], index: 1, kind: input, shape index: {}]
  %s2 = inlined_call_operand.vmem [shape: f32[4,1], index: 2, kind: input, shape index: {}]
  %s3 = inlined_call_operand.hbm [shape: f32[4,8], index: 3, kind: output, shape index: {}]
  %s4 = sld [smem:[#allocation0]]
  $region26: #{tpu_custom_call.1} parent=0
    _
  %s6 = ssub.s32 1, %s4
  %s7 = scalar_select 0, %s6, %s4
  $region1: #{tpu_custom_call.1} parent=0
    #allocation2 [shape = 'u8[16384]{0}', space=vmem, size = 0x4000, scoped, tag = 'input window, operand 1, single buffered']
    #allocation3 [shape = 's32[1]{0}', space=sflag, size = 0x4, scoped, tag = 'scoped memory for tpu_custom_call.1']
    #allocation4 [shape = 's32[1]{0}', space=sflag, size = 0x4, scoped, tag = 'scoped memory for tpu_custom_call.1']
    #allocation5 [shape = 'u8[2048]{0}', space=vmem, size = 0x800, scoped, tag = 'output window, operand 0, single buffered']
    %8 = vsyncpa [#allocation3], 0
    %9 = vsyncpa [#allocation4], 0
    // Predicated region
    $region2: #{tpu_custom_call.1} parent=1 // pred_check
      _
    $region3: #{tpu_custom_call.1} parent=1 // pred_check_branch
      %11 = sbr.rel (0) target = $region5
    $region4: #{tpu_custom_call.1} parent=1 // pred_region
      _
    $region5: #{tpu_custom_call.1} parent=1 // pred_fallthru
      _
    // Predicated region
    $region6: #{tpu_custom_call.1} parent=1 // pred_check
      _
    $region7: #{tpu_custom_call.1} parent=1 // pred_check_branch
      %13 = sbr.rel (0) target = $region9
    $region8: #{tpu_custom_call.1} parent=1 // pred_region
      %s15 = ssub.s32 512, 512
      %16 = vsyncadd [#allocation3], %s15
      %s17 = sshll.u32 [#allocation2], 4
      %s18 = int_to_ptr.vmem [resolvable:$true] %s17
      %23 = dma.hbm_to_vmem [thread:$0]  %s1, 512, %s18, [#allocation3], 64, 64, 4
    $region9: #{tpu_custom_call.1} parent=1 // pred_fallthru
      _
    // Predicated region
    $region10: #{tpu_custom_call.1} parent=1 // pred_check
      _
    $region11: #{tpu_custom_call.1} parent=1 // pred_check_branch
      %25 = sbr.rel (0) target = $region13
    $region12: #{tpu_custom_call.1} parent=1 // pred_region
      _
    $region13: #{tpu_custom_call.1} parent=1 // pred_fallthru
      _
    // Predicated region
    $region14: #{tpu_custom_call.1} parent=1 // pred_check
      _
    $region15: #{tpu_custom_call.1} parent=1 // pred_check_branch
      %27 = sbr.rel (0) target = $region17
    $region16: #{tpu_custom_call.1} parent=1 // pred_region
      %28 = dma.done [#allocation3], 512
    $region17: #{tpu_custom_call.1} parent=1 // pred_fallthru
      _
    %v29 = vld [vmem:[%s0] sm:$0xf]
    %v30 = vld [vmem:[#allocation2] sm:$0xf]
    %v31 = vld [vmem:[#allocation2 + $0x4] sm:$0xf]
    %v32 = vld [vmem:[#allocation2 + $0x8] sm:$0xf]
    %v33 = vld [vmem:[#allocation2 + $0xc] sm:$0xf]
    %v34 = vld [vmem:[#allocation2 + $0x10] sm:$0xf]
    %v35 = vld [vmem:[#allocation2 + $0x14] sm:$0xf]
    %v36 = vld [vmem:[#allocation2 + $0x18] sm:$0xf]
    %v37 = vld [vmem:[#allocation2 + $0x1c] sm:$0xf]
    %v38 = vmul.f32 %v29, %v30
    %v39 = vmul.f32 %v29, %v31
    %v40 = vmul.f32 %v29, %v32
    %v41 = vmul.f32 %v29, %v33
    %v42 = vmul.f32 %v29, %v34
    %v43 = vmul.f32 %v29, %v35
    %v44 = vmul.f32 %v29, %v36
    %v45 = vmul.f32 %v29, %v37
    %vm46 = vcmask 257024
    %v47 = vsel %vm46, %v38, 0.0
    %48 = vadd.xlane.f32.xlu0 %v47
    %v49 = vpop.xlane.xlu0 %48
    %v50 = vsel %vm46, %v39, 0.0
    %51 = vadd.xlane.f32.xlu0 %v50
    %v52 = vpop.xlane.xlu0 %51
    %v53 = vsel %vm46, %v40, 0.0
    %54 = vadd.xlane.f32.xlu0 %v53
    %v55 = vpop.xlane.xlu0 %54
    %v56 = vsel %vm46, %v41, 0.0
    %57 = vadd.xlane.f32.xlu0 %v56
    %v58 = vpop.xlane.xlu0 %57
    %v59 = vsel %vm46, %v42, 0.0
    %60 = vadd.xlane.f32.xlu0 %v59
    %v61 = vpop.xlane.xlu0 %60
    %v62 = vsel %vm46, %v43, 0.0
    %63 = vadd.xlane.f32.xlu0 %v62
    %v64 = vpop.xlane.xlu0 %63
    %v65 = vsel %vm46, %v44, 0.0
    %66 = vadd.xlane.f32.xlu0 %v65
    %v67 = vpop.xlane.xlu0 %66
    %v68 = vsel %vm46, %v45, 0.0
    %69 = vadd.xlane.f32.xlu0 %v68
    %v70 = vpop.xlane.xlu0 %69
    %v79 = vlaneseq
    %v80 = vand.u32 %v79, 127
    %v81 = vlaneseq
    %v82 = vshrl.u32 %v81, 7
    %v83 = vsub.s32 %v80, %v82
    %v84 = vrot.slane %v49, %v83
    %v85 = vlaneseq
    %v86 = vshrl.u32 %v85, 7
    %v87 = vsub.s32 %v80, %v86
    %v88 = vrot.slane %v52, %v87
    %v89 = vlaneseq
    %v90 = vshrl.u32 %v89, 7
    %v91 = vsub.s32 %v80, %v90
    %v92 = vrot.slane %v55, %v91
    %v93 = vlaneseq
    %v94 = vshrl.u32 %v93, 7
    %v95 = vsub.s32 %v80, %v94
    %v96 = vrot.slane %v58, %v95
    %v97 = vlaneseq
    %v98 = vshrl.u32 %v97, 7
    %v99 = vsub.s32 %v80, %v98
    %v100 = vrot.slane %v61, %v99
    %v101 = vlaneseq
    %v102 = vshrl.u32 %v101, 7
    %v103 = vsub.s32 %v80, %v102
    %v104 = vrot.slane %v64, %v103
    %v105 = vlaneseq
    %v106 = vshrl.u32 %v105, 7
    %v107 = vsub.s32 %v80, %v106
    %v108 = vrot.slane %v67, %v107
    %v109 = vlaneseq
    %v110 = vshrl.u32 %v109, 7
    %v111 = vsub.s32 %v80, %v110
    %v112 = vrot.slane %v70, %v111
    %vm113 = vcmask 1041409
    %v114 = vsel %vm113, %v88, %v84
    %vm115 = vcmask 1042434
    %v116 = vsel %vm115, %v92, %v114
    %vm117 = vcmask 1043459
    %v118 = vsel %vm117, %v96, %v116
    %vm119 = vcmask 1044484
    %v120 = vsel %vm119, %v100, %v118
    %vm121 = vcmask 1045509
    %v122 = vsel %vm121, %v104, %v120
    %vm123 = vcmask 1046534
    %v124 = vsel %vm123, %v108, %v122
    %vm125 = vcmask 1047559
    %v126 = vsel %vm125, %v112, %v124
    %128 = vxpose.xlu0.b32.start [1/16] %v126, 128
    %129 = vxpose.xlu0.b32.cont [2/16] 0.0, 128
    %130 = vxpose.xlu0.b32.cont [3/16] 0.0, 128
    %131 = vxpose.xlu0.b32.cont [4/16] 0.0, 128
    %132 = vxpose.xlu0.b32.cont [5/16] 0.0, 128
    %133 = vxpose.xlu0.b32.cont [6/16] 0.0, 128
    %134 = vxpose.xlu0.b32.cont [7/16] 0.0, 128
    %135 = vxpose.xlu0.b32.cont [8/16] 0.0, 128
    %136 = vxpose.xlu0.b32.cont [9/16] 0.0, 128
    %137 = vxpose.xlu0.b32.cont [10/16] 0.0, 128
    %138 = vxpose.xlu0.b32.cont [11/16] 0.0, 128
    %139 = vxpose.xlu0.b32.cont [12/16] 0.0, 128
    %140 = vxpose.xlu0.b32.cont [13/16] 0.0, 128
    %141 = vxpose.xlu0.b32.cont [14/16] 0.0, 128
    %142 = vxpose.xlu0.b32.cont [15/16] 0.0, 128
    %143 = vxpose.xlu0.b32.end [16/16] 0.0, 128
    %v144 = vpop.trf.xlu0
    %v145 = vpop.trf.xlu0
    %v146 = vpop.trf.xlu0
    %v147 = vpop.trf.xlu0
    %v148 = vpop.trf.xlu0
    %v149 = vpop.trf.xlu0
    %v150 = vpop.trf.xlu0
    %v151 = vpop.trf.xlu0
    %v152 = vpop.trf.xlu0
    %v153 = vpop.trf.xlu0
    %v154 = vpop.trf.xlu0
    %v155 = vpop.trf.xlu0
    %v156 = vpop.trf.xlu0
    %v157 = vpop.trf.xlu0
    %v158 = vpop.trf.xlu0
    %v159 = vpop.trf.xlu0
    %v160 = vld [vmem:[%s2] sm:$0xf]
    %162 = vset.pattern.permute.xlu0 0
    %163 = vperm.xlu0 %162, %v160
    %v164 = vpop.permute.xlu0 %163
    %v166 = vadd.f32 %v144, %v164
    %vm167 = vcmask 60416
    %v168 = vsel %vm167, %v166, -inf
    %169 = vmax.xlane.f32.xlu0 %v168
    %v170 = vpop.xlane.xlu0 %169
    %v171 = vsub.f32 %v166, %v170
    %v172 = vmul.f32 %v171, 1.442695
    %v173 = vpow.pop %v172
    %v174 = vsel %vm167, %v173, 0.0
    %175 = vadd.xlane.f32.xlu0 %v174
    %v176 = vpop.xlane.xlu0 %175
    %v177 = vrcp.pop %v176
    %v178 = vmul.f32 %v173, %v177
    %179 = vst.msk [vmem:[#allocation5] sm:$0xf] %vm167, %v178
    // Predicated region
    $region18: #{tpu_custom_call.1} parent=1 // pred_check
      _
    $region19: #{tpu_custom_call.1} parent=1 // pred_check_branch
      %181 = sbr.rel (0) target = $region21
    $region20: #{tpu_custom_call.1} parent=1 // pred_region
      %s183 = ssub.s32 64, 64
      %184 = vsyncadd [#allocation4], %s183
      %s186 = sshll.u32 [#allocation5], 4
      %s187 = int_to_ptr.vmem [resolvable:$true] %s186
      %189 = dma.vmem_to_hbm [thread:$0]  %s187, 64, %s3, [#allocation4]
    $region21: #{tpu_custom_call.1} parent=1 // pred_fallthru
      _
    // Predicated region
    $region22: #{tpu_custom_call.1} parent=1 // pred_check
      _
    $region23: #{tpu_custom_call.1} parent=1 // pred_check_branch
      %191 = sbr.rel (0) target = $region25
    $region24: #{tpu_custom_call.1} parent=1 // pred_region
      %192 = dma.done [#allocation4], 64
    $region25: #{tpu_custom_call.1} parent=1 // pred_fallthru
      _
    %193 = vsyncpa [#allocation3], 1
    %194 = vsyncpa [#allocation4], 1

</llo_original>
